<compile_context>
chip_gen: v7x
topology: tpu7x:2x2x1
jax: 0.10.0
libtpu: 0.0.40
codegen_flags: <defaults>
</compile_context>

<pallas_src>
import functools

import jax
import jax.numpy as jnp
from jax.experimental import pallas as pl
from jax.experimental.pallas import tpu as pltpu


_NEG_INF = -1e30  # finite "−inf": exp(_NEG_INF − m) underflows to exactly 0


def _round_up(n: int, m: int) -> int:
    return ((n + m - 1) // m) * m


def relation_classifier_kernel(x_ref, w1_ref, b1_ref, w2_ref, b2_ref, o_ref):
    # hidden = relu(x @ W1 + b1)  — bf16 operands, f32 accumulation
    h = jnp.dot(x_ref[...], w1_ref[...], preferred_element_type=jnp.float32)
    h = h + b1_ref[...]                      # (TB, Hp) + (1, Hp)
    h = jnp.maximum(h, 0.0)

    # logits = hidden @ W2 + b2  — cast activations to bf16 for the MXU
    logits = jnp.dot(h.astype(jnp.bfloat16), w2_ref[...],
                     preferred_element_type=jnp.float32)
    logits = logits + b2_ref[...]            # padded class cols carry -1e30 bias

    # numerically-stable log_softmax over the (padded, lane-dense) class axis
    m = jnp.max(logits, axis=-1, keepdims=True)
    shifted = logits - m
    lse = jnp.log(jnp.sum(jnp.exp(shifted), axis=-1, keepdims=True))
    o_ref[...] = (shifted - lse).astype(o_ref.dtype)


@functools.partial(jax.jit, static_argnames=("batch_tile",))
def relation_classifier_forward(x, w1, b1, w2, b2, *, batch_tile=256):
    """x: (B, input_dim); w1: (input_dim, hidden); b1: (hidden,) or (1, hidden);
       w2: (hidden, output); b2: (output,) or (1, output).
       Returns f32 log-probabilities of shape (B, output)."""
    B, D_in = x.shape
    H = w1.shape[1]
    O = w2.shape[1]

    H_pad = _round_up(H, 128)
    O_pad = _round_up(O, 128)

    # bf16 MXU inputs, lane-padded weights/biases (zero padding is a no-op for
    # x @ W + b; padded class columns masked via the -1e30 bias).
    xb = x.astype(jnp.bfloat16)
    w1p = jnp.zeros((D_in, H_pad), jnp.bfloat16).at[:, :H].set(
        w1.astype(jnp.bfloat16))
    b1p = jnp.zeros((1, H_pad), jnp.float32).at[:, :H].set(
        b1.reshape(1, -1).astype(jnp.float32))
    w2p = jnp.zeros((H_pad, O_pad), jnp.bfloat16).at[:H, :O].set(
        w2.astype(jnp.bfloat16))
    b2p = jnp.full((1, O_pad), _NEG_INF, jnp.float32).at[:, :O].set(
        b2.reshape(1, -1).astype(jnp.float32))

    # Batch tile: multiple of 8 sublanes, capped by batch_tile. Pad B so the
    # grid divides evenly; padded rows are zeros and sliced off afterwards.
    TB = _round_up(min(batch_tile, _round_up(B, 8)), 8)
    B_pad = _round_up(B, TB)
    if B_pad != B:
        xb = jnp.zeros((B_pad, D_in), jnp.bfloat16).at[:B].set(xb)

    grid = (pl.cdiv(B_pad, TB),)

    out = pl.pallas_call(
        relation_classifier_kernel,
        out_shape=jax.ShapeDtypeStruct((B_pad, O_pad), jnp.float32),
        grid=grid,
        in_specs=[
            pl.BlockSpec((TB, D_in), lambda i: (i, 0)),       # x: batch-tiled
            pl.BlockSpec((D_in, H_pad), lambda i: (0, 0)),    # W1: resident
            pl.BlockSpec((1, H_pad), lambda i: (0, 0)),       # b1: resident
            pl.BlockSpec((H_pad, O_pad), lambda i: (0, 0)),   # W2: resident
            pl.BlockSpec((1, O_pad), lambda i: (0, 0)),       # b2: resident
        ],
        out_specs=pl.BlockSpec((TB, O_pad), lambda i: (i, 0)),
        compiler_params=pltpu.CompilerParams(
            dimension_semantics=("parallel",),
        ),
    )(xb, w1p, b1p, w2p, b2p)

    return out[:B, :O]


def reference_forward_bf16(x, w1, b1, w2, b2):
    """Mirrors the kernel's bf16-operand / f32-accumulate math."""
    xb = x.astype(jnp.bfloat16)
    w1b = w1.astype(jnp.bfloat16)
    w2b = w2.astype(jnp.bfloat16)
    h = jnp.dot(xb, w1b, preferred_element_type=jnp.float32) + b1.reshape(1, -1)
    h = jnp.maximum(h, 0.0)
    logits = (jnp.dot(h.astype(jnp.bfloat16), w2b,
                      preferred_element_type=jnp.float32) + b2.reshape(1, -1))
    return jax.nn.log_softmax(logits, axis=-1)


def reference_forward_f32(x, w1, b1, w2, b2):
    h = jnp.maximum(x @ w1 + b1.reshape(1, -1), 0.0)
    logits = h @ w2 + b2.reshape(1, -1)
    return jax.nn.log_softmax(logits, axis=-1)


if __name__ == "__main__":
    # Small, deterministic shapes consistent with the module's __init__.
    B, INPUT_DIM, HIDDEN_DIM, OUTPUT_DIM = 8, 32, 32, 8

    key = jax.random.PRNGKey(0)
    kx, kw1, kb1, kw2, kb2, kx2 = jax.random.split(key, 6)

    x = jax.random.normal(kx, (B, INPUT_DIM), dtype=jnp.float32)
    # nn.Linear stores weight as (out, in); we keep the transposed (in, out)
    # layout so the kernel multiplies directly.
    w1 = jax.random.normal(kw1, (INPUT_DIM, HIDDEN_DIM), dtype=jnp.float32) * 0.1
    b1 = jax.random.normal(kb1, (HIDDEN_DIM,), dtype=jnp.float32) * 0.1
    w2 = jax.random.normal(kw2, (HIDDEN_DIM, OUTPUT_DIM), dtype=jnp.float32) * 0.1
    b2 = jax.random.normal(kb2, (OUTPUT_DIM,), dtype=jnp.float32) * 0.1

    # --- small batch (single grid step) ---
    out = jax.block_until_ready(relation_classifier_forward(x, w1, b1, w2, b2))
    ref = reference_forward_bf16(x, w1, b1, w2, b2)
    ref_f32 = reference_forward_f32(x, w1, b1, w2, b2)
    assert out.shape == (B, OUTPUT_DIM)
    assert not jnp.any(jnp.isnan(out))
    assert jnp.allclose(out, ref, atol=1e-4, rtol=1e-4)
    assert jnp.allclose(out, ref_f32, atol=5e-2, rtol=5e-2)

    # --- larger, non-aligned batch exercising the batch grid + padding path ---
    B2 = 300
    x2 = jax.random.normal(kx2, (B2, INPUT_DIM), dtype=jnp.float32)
    out2 = jax.block_until_ready(
        relation_classifier_forward(x2, w1, b1, w2, b2, batch_tile=128))
    ref2 = reference_forward_bf16(x2, w1, b1, w2, b2)
    assert out2.shape == (B2, OUTPUT_DIM)
    assert not jnp.any(jnp.isnan(out2))
    assert jnp.allclose(out2, ref2, atol=1e-4, rtol=1e-4)

    print("KERNEL_OK")
</pallas_src>

<mosaic_0001>
module attributes {stable_mosaic.version = 11 : i64} {
  func.func @relation_classifier_kernel(%arg0: i32, %arg1: memref<8x32xbf16, #tpu.memory_space<vmem>>, %arg2: memref<32x128xbf16, #tpu.memory_space<vmem>>, %arg3: memref<1x128xf32, #tpu.memory_space<vmem>>, %arg4: memref<128x128xbf16, #tpu.memory_space<vmem>>, %arg5: memref<1x128xf32, #tpu.memory_space<vmem>>, %arg6: memref<8x128xf32, #tpu.memory_space<vmem>>) attributes {dimension_semantics = [#tpu.dimension_semantics<parallel>], iteration_bounds = array<i64: 1>, scalar_prefetch = 0 : i64, scratch_operands = 0 : i64, tpu.core_type = #tpu.core_type<tc>, window_params = [{transform_indices = @transform_0, window_bounds = array<i64: 8, 32>}, {pipeline_mode = #tpu.pipeline_mode<synchronous>, transform_indices = @transform_1, window_bounds = array<i64: 32, 128>}, {pipeline_mode = #tpu.pipeline_mode<synchronous>, transform_indices = @transform_2, window_bounds = array<i64: 1, 128>}, {pipeline_mode = #tpu.pipeline_mode<synchronous>, transform_indices = @transform_3, window_bounds = array<i64: 128, 128>}, {pipeline_mode = #tpu.pipeline_mode<synchronous>, transform_indices = @transform_4, window_bounds = array<i64: 1, 128>}, {transform_indices = @transform_5, window_bounds = array<i64: 8, 128>}]} {
    %c0 = arith.constant 0 : index
    %c0_0 = arith.constant 0 : index
    %0 = vector.load %arg1[%c0, %c0_0] : memref<8x32xbf16, #tpu.memory_space<vmem>>, vector<8x32xbf16>
    %c0_1 = arith.constant 0 : index
    %c0_2 = arith.constant 0 : index
    %1 = vector.load %arg2[%c0_1, %c0_2] : memref<32x128xbf16, #tpu.memory_space<vmem>>, vector<32x128xbf16>
    %cst = arith.constant dense<0.000000e+00> : vector<8x128xf32>
    %2 = tpu.matmul %0, %1, %cst {dimension_numbers = #tpu.dot_dimension_numbers<[1], [0], [0], [1], [0, 0, 1, 1], [], []>} : vector<8x32xbf16>, vector<32x128xbf16>, vector<8x128xf32> -> vector<8x128xf32>
    %c0_3 = arith.constant 0 : index
    %c0_4 = arith.constant 0 : index
    %3 = vector.load %arg3[%c0_3, %c0_4] : memref<1x128xf32, #tpu.memory_space<vmem>>, vector<1x128xf32>
    %4 = vector.broadcast %3 : vector<1x128xf32> to vector<8x128xf32>
    %5 = arith.addf %2, %4 : vector<8x128xf32>
    %cst_5 = arith.constant 0.000000e+00 : f32
    %6 = vector.broadcast %cst_5 : f32 to vector<8x128xf32>
    %7 = arith.maximumf %5, %6 : vector<8x128xf32>
    %8 = arith.truncf %7 : vector<8x128xf32> to vector<8x128xbf16>
    %c0_6 = arith.constant 0 : index
    %c0_7 = arith.constant 0 : index
    %9 = vector.load %arg4[%c0_6, %c0_7] : memref<128x128xbf16, #tpu.memory_space<vmem>>, vector<128x128xbf16>
    %cst_8 = arith.constant dense<0.000000e+00> : vector<8x128xf32>
    %10 = tpu.matmul %8, %9, %cst_8 {dimension_numbers = #tpu.dot_dimension_numbers<[1], [0], [0], [1], [0, 0, 1, 1], [], []>} : vector<8x128xbf16>, vector<128x128xbf16>, vector<8x128xf32> -> vector<8x128xf32>
    %c0_9 = arith.constant 0 : index
    %c0_10 = arith.constant 0 : index
    %11 = vector.load %arg5[%c0_9, %c0_10] : memref<1x128xf32, #tpu.memory_space<vmem>>, vector<1x128xf32>
    %12 = vector.broadcast %11 : vector<1x128xf32> to vector<8x128xf32>
    %13 = arith.addf %10, %12 : vector<8x128xf32>
    %cst_11 = arith.constant dense<0xFF800000> : vector<8xf32>
    %14 = vector.multi_reduction <maximumf>, %13, %cst_11 [1] : vector<8x128xf32> to vector<8xf32>
    %15 = vector.shape_cast %14 : vector<8xf32> to vector<8x1xf32>
    %16 = vector.broadcast %15 : vector<8x1xf32> to vector<8x128xf32>
    %17 = arith.subf %13, %16 : vector<8x128xf32>
    %18 = math.exp %17 : vector<8x128xf32>
    %cst_12 = arith.constant dense<0.000000e+00> : vector<8xf32>
    %19 = vector.multi_reduction <add>, %18, %cst_12 [1] : vector<8x128xf32> to vector<8xf32>
    %20 = vector.shape_cast %19 : vector<8xf32> to vector<8x1xf32>
    %21 = math.log %20 : vector<8x1xf32>
    %22 = vector.broadcast %21 : vector<8x1xf32> to vector<8x128xf32>
    %23 = arith.subf %17, %22 : vector<8x128xf32>
    %c0_13 = arith.constant 0 : index
    %c0_14 = arith.constant 0 : index
    %24 = vector.load %arg6[%c0_13, %c0_14] : memref<8x128xf32, #tpu.memory_space<vmem>>, vector<8x128xf32>
    tpu.vector_store %arg6[%c0_13, %c0_14], %23 {strides = array<i32>} : memref<8x128xf32, #tpu.memory_space<vmem>>, vector<8x128xf32>,
    return
  }
  func.func @transform_0(%arg0: i32) -> (i32, i32) {
    %c0_i32 = arith.constant 0 : i32
    %c0_i32_0 = arith.constant 0 : i32
    return %arg0, %c0_i32 : i32, i32
  }
  func.func @transform_1(%arg0: i32) -> (i32, i32) {
    %c0_i32 = arith.constant 0 : i32
    %c0_i32_0 = arith.constant 0 : i32
    %c0_i32_1 = arith.constant 0 : i32
    return %c0_i32, %c0_i32_0 : i32, i32
  }
  func.func @transform_2(%arg0: i32) -> (i32, i32) {
    %c0_i32 = arith.constant 0 : i32
    %c0_i32_0 = arith.constant 0 : i32
    %c0_i32_1 = arith.constant 0 : i32
    return %c0_i32, %c0_i32_0 : i32, i32
  }
  func.func @transform_3(%arg0: i32) -> (i32, i32) {
    %c0_i32 = arith.constant 0 : i32
    %c0_i32_0 = arith.constant 0 : i32
    %c0_i32_1 = arith.constant 0 : i32
    return %c0_i32, %c0_i32_0 : i32, i32
  }
  func.func @transform_4(%arg0: i32) -> (i32, i32) {
    %c0_i32 = arith.constant 0 : i32
    %c0_i32_0 = arith.constant 0 : i32
    %c0_i32_1 = arith.constant 0 : i32
    return %c0_i32, %c0_i32_0 : i32, i32
  }
  func.func @transform_5(%arg0: i32) -> (i32, i32) {
    %c0_i32 = arith.constant 0 : i32
    %c0_i32_0 = arith.constant 0 : i32
    return %arg0, %c0_i32 : i32, i32
  }
}

</mosaic_0001>

<llo_original>
// kernel: relation_classifier_forward.1
$region0: #{relation_classifier_forward.1}
  #allocation0 [shape = 'u32[]', space=smem, size = 0x4, offset = 0x4, fixed_abs, tag = 'smem constant byte address 0x4 - core index']
  #allocation1 [shape = 'u32[144,128]{1,0:T(1,128)}', space=vmem, size = 0x12000, scoped, tag = 'internal scratch']
  %s0 = inlined_call_operand.vmem [shape: bf16[8,32], index: 0, kind: input, shape index: {}]
  %s1 = inlined_call_operand.vmem [shape: bf16[32,128], index: 1, kind: input, shape index: {}]
  %s2 = inlined_call_operand.vmem [shape: f32[1,128], index: 2, kind: input, shape index: {}]
  %s3 = inlined_call_operand.vmem [shape: bf16[128,128], index: 3, kind: input, shape index: {}]
  %s4 = inlined_call_operand.vmem [shape: f32[1,128], index: 4, kind: input, shape index: {}]
  %s5 = inlined_call_operand.hbm [shape: f32[8,128], index: 5, kind: output, shape index: {}]
  %s6 = sld [smem:[#allocation0]]
  $region30: #{relation_classifier_forward.1} parent=0
    _
  %s8 = ssub.s32 1, %s6
  %s9 = scalar_select 0, %s8, %s6
  $region1: #{relation_classifier_forward.1} parent=0
    #allocation2 [shape = 'u8[4096]{0}', space=vmem, size = 0x1000, scoped, tag = 'output window, operand 0, single buffered']
    #allocation3 [shape = 's32[1]{0}', space=sflag, size = 0x4, scoped, tag = 'scoped memory for relation_classifier_forward.1']
    %10 = vsyncpa [#allocation3], 0
    // Predicated region
    $region2: #{relation_classifier_forward.1} parent=1 // pred_check
      _
    $region3: #{relation_classifier_forward.1} parent=1 // pred_check_branch
      %12 = sbr.rel (0) target = $region5
    $region4: #{relation_classifier_forward.1} parent=1 // pred_region
      _
    $region5: #{relation_classifier_forward.1} parent=1 // pred_fallthru
      _
    // Predicated region
    $region6: #{relation_classifier_forward.1} parent=1 // pred_check
      _
    $region7: #{relation_classifier_forward.1} parent=1 // pred_check_branch
      %14 = sbr.rel (0) target = $region9
    $region8: #{relation_classifier_forward.1} parent=1 // pred_region
      _
    $region9: #{relation_classifier_forward.1} parent=1 // pred_fallthru
      _
    // Predicated region
    $region10: #{relation_classifier_forward.1} parent=1 // pred_check
      _
    $region11: #{relation_classifier_forward.1} parent=1 // pred_check_branch
      %16 = sbr.rel (0) target = $region13
    $region12: #{relation_classifier_forward.1} parent=1 // pred_region
      _
    $region13: #{relation_classifier_forward.1} parent=1 // pred_fallthru
      _
    // Predicated region
    $region14: #{relation_classifier_forward.1} parent=1 // pred_check
      _
    $region15: #{relation_classifier_forward.1} parent=1 // pred_check_branch
      %18 = sbr.rel (0) target = $region17
    $region16: #{relation_classifier_forward.1} parent=1 // pred_region
      _
    $region17: #{relation_classifier_forward.1} parent=1 // pred_fallthru
      _
    // Predicated region
    $region18: #{relation_classifier_forward.1} parent=1 // pred_check
      _
    $region19: #{relation_classifier_forward.1} parent=1 // pred_check_branch
      %20 = sbr.rel (0) target = $region21
    $region20: #{relation_classifier_forward.1} parent=1 // pred_region
      _
    $region21: #{relation_classifier_forward.1} parent=1 // pred_fallthru
      _
    %v22 = vld [vmem:[%s0] sm:$0xf]
    %v23 = vld [vmem:[%s1] sm:$0xf]
    %v24 = vld [vmem:[%s1 + $0x4] sm:$0xf]
    %v25 = vld [vmem:[%s1 + $0x8] sm:$0xf]
    %v26 = vld [vmem:[%s1 + $0xc] sm:$0xf]
    %v27 = vld [vmem:[%s2] sm:$0x1]
    %v29 = vlaneseq
    %v30 = vshrl.u32 %v29, 7
    %v31 = vsub.s32 0, %v30
    %v32 = vrot.slane %v27, %v31
    %v38 = vunpack.c.l.b16 %v23
    %v39 = vunpack.c.l.b16 %v24
    %v40 = vunpack.c.l.b16 %v25
    %v41 = vunpack.c.l.b16 %v26
    %v42 = vpack.c.b16 %v39, %v38
    %v43 = vpack.c.b16 %v41, %v40
    %vm46 = vcmask 261120
    %v48 = vsel %vm46, %v22, 0
    %50 = vmatprep.subr.bf16.mxu0 0
    %51 = vmatpush1.bf16.msra.mxu0 %v42
    %52 = vmatprep.subr.bf16.mxu0 0
    %53 = vmatpush1.bf16.msra.mxu0 %v43
    %54 = vmatprep.subr.bf16.mxu0 0
    %55 = vmatpush1.bf16.msra.mxu0 0
    %56 = vmatprep.subr.bf16.mxu0 0
    %57 = vmatpush1.bf16.msra.mxu0 0
    %58 = vmatprep.subr.bf16.mxu0 0
    %59 = vmatpush1.bf16.msra.mxu0 0
    %60 = vmatprep.subr.bf16.mxu0 0
    %61 = vmatpush1.bf16.msra.mxu0 0
    %62 = vmatprep.subr.bf16.mxu0 0
    %63 = vmatpush1.bf16.msra.mxu0 0
    %64 = vmatprep.subr.bf16.mxu0 0
    %65 = vmatpush1.bf16.msra.mxu0 0
    %66 = vmatprep.subr.bf16.mxu0 0
    %67 = vmatpush1.bf16.msra.mxu0 0
    %68 = vmatprep.subr.bf16.mxu0 0
    %69 = vmatpush1.bf16.msra.mxu0 0
    %70 = vmatprep.subr.bf16.mxu0 0
    %71 = vmatpush1.bf16.msra.mxu0 0
    %72 = vmatprep.subr.bf16.mxu0 0
    %73 = vmatpush1.bf16.msra.mxu0 0
    %74 = vmatprep.subr.bf16.mxu0 0
    %75 = vmatpush1.bf16.msra.mxu0 0
    %76 = vmatprep.subr.bf16.mxu0 0
    %77 = vmatpush1.bf16.msra.mxu0 0
    %78 = vmatprep.subr.bf16.mxu0 0
    %79 = vmatpush1.bf16.msra.mxu0 0
    %80 = vmatprep.subr.bf16.mxu0 0
    %81 = vmatpush1.bf16.msra.mxu0 0
    %82 = vmatprep.mubr.bf16.mxu0 0
    %83 = vmatmul.mubr.bf16.gmra.mrb[0].mxu0 %v48
    %v84 = vpop.f32.mrb[0].mxu0
    %v85 = vadd.f32 %v32, %v84
    %v86 = vpop.f32.mrb[0].mxu0
    %v87 = vpop.f32.mrb[0].mxu0
    %v88 = vpop.f32.mrb[0].mxu0
    %89 = vdwg.mxu0
    %v90 = vmax.f32 %v85, 0.0
    %v91 = vpack.c.bf16 %v90, %v90
    %v92 = vld [vmem:[%s3] sm:$0xf]
    %v93 = vld [vmem:[%s3 + $0x4] sm:$0xf]
    %v94 = vld [vmem:[%s3 + $0x8] sm:$0xf]
    %v95 = vld [vmem:[%s3 + $0xc] sm:$0xf]
    %v96 = vld [vmem:[%s3 + $0x10] sm:$0xf]
    %v97 = vld [vmem:[%s3 + $0x14] sm:$0xf]
    %v98 = vld [vmem:[%s3 + $0x18] sm:$0xf]
    %v99 = vld [vmem:[%s3 + $0x1c] sm:$0xf]
    %v100 = vld [vmem:[%s3 + $0x20] sm:$0xf]
    %v101 = vld [vmem:[%s3 + $0x24] sm:$0xf]
    %v102 = vld [vmem:[%s3 + $0x28] sm:$0xf]
    %v103 = vld [vmem:[%s3 + $0x2c] sm:$0xf]
    %v104 = vld [vmem:[%s3 + $0x30] sm:$0xf]
    %v105 = vld [vmem:[%s3 + $0x34] sm:$0xf]
    %v106 = vld [vmem:[%s3 + $0x38] sm:$0xf]
    %v107 = vld [vmem:[%s3 + $0x3c] sm:$0xf]
    %v108 = vld [vmem:[%s4] sm:$0x1]
    %v110 = vlaneseq
    %v111 = vshrl.u32 %v110, 7
    %v112 = vsub.s32 0, %v111
    %v113 = vrot.slane %v108, %v112
    %v131 = vunpack.c.l.b16 %v92
    %v132 = vunpack.c.l.b16 %v93
    %v133 = vunpack.c.l.b16 %v94
    %v134 = vunpack.c.l.b16 %v95
    %v135 = vunpack.c.l.b16 %v96
    %v136 = vunpack.c.l.b16 %v97
    %v137 = vunpack.c.l.b16 %v98
    %v138 = vunpack.c.l.b16 %v99
    %v139 = vunpack.c.l.b16 %v100
    %v140 = vunpack.c.l.b16 %v101
    %v141 = vunpack.c.l.b16 %v102
    %v142 = vunpack.c.l.b16 %v103
    %v143 = vunpack.c.l.b16 %v104
    %v144 = vunpack.c.l.b16 %v105
    %v145 = vunpack.c.l.b16 %v106
    %v146 = vunpack.c.l.b16 %v107
    %v147 = vpack.c.b16 %v132, %v131
    %v148 = vpack.c.b16 %v134, %v133
    %v149 = vpack.c.b16 %v136, %v135
    %v150 = vpack.c.b16 %v138, %v137
    %v151 = vpack.c.b16 %v140, %v139
    %v152 = vpack.c.b16 %v142, %v141
    %v153 = vpack.c.b16 %v144, %v143
    %v154 = vpack.c.b16 %v146, %v145
    %163 = vmatprep.subr.bf16.mxu0 0
    %164 = vmatpush1.bf16.msra.mxu0 %v147
    %165 = vmatprep.subr.bf16.mxu0 0
    %166 = vmatpush1.bf16.msra.mxu0 %v148
    %167 = vmatprep.subr.bf16.mxu0 0
    %168 = vmatpush1.bf16.msra.mxu0 %v149
    %169 = vmatprep.subr.bf16.mxu0 0
    %170 = vmatpush1.bf16.msra.mxu0 %v150
    %171 = vmatprep.subr.bf16.mxu0 0
    %172 = vmatpush1.bf16.msra.mxu0 %v151
    %173 = vmatprep.subr.bf16.mxu0 0
    %174 = vmatpush1.bf16.msra.mxu0 %v152
    %175 = vmatprep.subr.bf16.mxu0 0
    %176 = vmatpush1.bf16.msra.mxu0 %v153
    %177 = vmatprep.subr.bf16.mxu0 0
    %178 = vmatpush1.bf16.msra.mxu0 %v154
    %179 = vmatprep.subr.bf16.mxu0 0
    %180 = vmatpush1.bf16.msra.mxu0 0
    %181 = vmatprep.subr.bf16.mxu0 0
    %182 = vmatpush1.bf16.msra.mxu0 0
    %183 = vmatprep.subr.bf16.mxu0 0
    %184 = vmatpush1.bf16.msra.mxu0 0
    %185 = vmatprep.subr.bf16.mxu0 0
    %186 = vmatpush1.bf16.msra.mxu0 0
    %187 = vmatprep.subr.bf16.mxu0 0
    %188 = vmatpush1.bf16.msra.mxu0 0
    %189 = vmatprep.subr.bf16.mxu0 0
    %190 = vmatpush1.bf16.msra.mxu0 0
    %191 = vmatprep.subr.bf16.mxu0 0
    %192 = vmatpush1.bf16.msra.mxu0 0
    %193 = vmatprep.subr.bf16.mxu0 0
    %194 = vmatpush1.bf16.msra.mxu0 0
    %195 = vmatprep.mubr.bf16.mxu0 0
    %196 = vmatmul.mubr.bf16.gmra.mrb[0].mxu0 %v91
    %v197 = vpop.f32.mrb[0].mxu0
    %v198 = vadd.f32 %v113, %v197
    %v199 = vpop.f32.mrb[0].mxu0
    %v200 = vpop.f32.mrb[0].mxu0
    %v201 = vpop.f32.mrb[0].mxu0
    %202 = vdwg.mxu0
    %203 = vmax.xlane.f32.xlu0 %v198
    %v204 = vpop.xlane.xlu0 %203
    %v205 = vsub.f32 %v198, %v204
    %v206 = vmul.f32 %v205, 1.442695
    %v207 = vpow.pop %v206
    %208 = vadd.xlane.f32.xlu0 %v207
    %v209 = vpop.xlane.xlu0 %208
    %v210 = vlog2.pop %v209
    %v211 = vmul.f32 %v210, 0.6931472
    %v212 = vsub.f32 %v205, %v211
    %213 = vst [vmem:[#allocation2] sm:$0xff] %v212
    // Predicated region
    $region22: #{relation_classifier_forward.1} parent=1 // pred_check
      _
    $region23: #{relation_classifier_forward.1} parent=1 // pred_check_branch
      %215 = sbr.rel (0) target = $region25
    $region24: #{relation_classifier_forward.1} parent=1 // pred_region
      %s217 = ssub.s32 128, 128
      %218 = vsyncadd [#allocation3], %s217
      %s220 = sshll.u32 [#allocation2], 4
      %s221 = int_to_ptr.vmem [resolvable:$true] %s220
      %223 = dma.vmem_to_hbm [thread:$0]  %s221, 128, %s5, [#allocation3]
    $region25: #{relation_classifier_forward.1} parent=1 // pred_fallthru
      _
    // Predicated region
    $region26: #{relation_classifier_forward.1} parent=1 // pred_check
      _
    $region27: #{relation_classifier_forward.1} parent=1 // pred_check_branch
      %225 = sbr.rel (0) target = $region29
    $region28: #{relation_classifier_forward.1} parent=1 // pred_region
      %226 = dma.done [#allocation3], 128
    $region29: #{relation_classifier_forward.1} parent=1 // pred_fallthru
      _
    %227 = vsyncpa [#allocation3], 1

</llo_original>
